<compile_context>
chip_gen: v7x
topology: tpu7x:2x2x1
jax: 0.10.0
libtpu: 0.0.40
codegen_flags: <defaults>
</compile_context>

<pallas_src>
import functools

import jax
import jax.numpy as jnp
from jax.experimental import pallas as pl
from jax.experimental.pallas import tpu as pltpu


def _round_up(x: int, m: int) -> int:
    return ((x + m - 1) // m) * m


def _vmem_limit(working_set_bytes: int) -> int:
    """Scoped-VMEM limit: working set + headroom, capped at ~75% of chip VMEM."""
    try:
        cap = int(pltpu.get_tpu_info().vmem_capacity_bytes)
    except Exception:
        cap = 64 << 20  # v7x per-TC capacity; conservative for v5e/v6e (128 MiB)
    return int(max(32 << 20, min(int(working_set_bytes) + (4 << 20), int(cap * 0.75))))


# --------------------------------------------------------------------------
# Pass 1: K-tiled GEMM (bf16 MXU operands, fp32 accumulation) + per-M-tile
#         partial per-channel sum / sum-of-squares.
# --------------------------------------------------------------------------
def _gemm_stats_kernel(x_ref, w_ref, y_ref, sum_ref, ssq_ref, acc_ref):
    k = pl.program_id(1)

    @pl.when(k == 0)
    def _():
        acc_ref[...] = jnp.zeros_like(acc_ref)

    acc_ref[...] += jnp.dot(x_ref[...], w_ref[...],
                            preferred_element_type=jnp.float32)

    @pl.when(k == pl.num_programs(1) - 1)
    def _():
        y = acc_ref[...]                                  # fp32 [tm, c_pad]
        y_ref[...] = y.astype(y_ref.dtype)                # bf16 writeback slab
        # Per-tile partial stats folded onto 8 sublanes (VPU adds over the
        # leading, untiled axis); wrapper tree-reduces across tiles & sublanes.
        yr = y.reshape(y.shape[0] // 8, 8, y.shape[1])
        sum_ref[...] = jnp.sum(yr, axis=0)
        ssq_ref[...] = jnp.sum(yr * yr, axis=0)


# --------------------------------------------------------------------------
# Pass 2: normalize + affine + activation (elementwise, lane-dense stores).
# --------------------------------------------------------------------------
def _bn_act_kernel(y_ref, scale_ref, shift_ref, o_ref, *, neg_slope):
    y = y_ref[...].astype(jnp.float32)
    y_hat = y * scale_ref[...] + shift_ref[...]
    if neg_slope is None:
        o_ref[...] = jnp.maximum(y_hat, 0.0).astype(o_ref.dtype)
    else:
        o_ref[...] = jnp.where(y_hat >= 0.0, y_hat, neg_slope * y_hat).astype(o_ref.dtype)


# --------------------------------------------------------------------------
# Wrapper
# --------------------------------------------------------------------------
def conv_block_forward(x, weight, gamma, beta, *, stride=2, padding=1,
                       eps=1e-5, relu_leak=None, tm=512, tk=1024,
                       lane_multiple=128, out_dtype=jnp.float32,
                       data_format="NCHW"):
    """x: [N, C_in, H, W] (NCHW), weight: [C_out, C_in, KH, KW] (PyTorch OIHW).

    Operands are quantized to bf16 for the MXU (stats / accumulation stay fp32);
    lane_multiple=256 is preferable on v6e/v7x when K and C_out are >= 256.
    """
    N, C_in, H, W = x.shape
    C_out, C_in_w, KH, KW = weight.shape
    assert C_in_w == C_in
    OH = (H + 2 * padding - KH) // stride + 1
    OW = (W + 2 * padding - KW) // stride + 1
    M = N * OH * OW
    K = C_in * KH * KW

    # ---- tiling / padding
    tm = max(8, (int(tm) // 8) * 8)
    m_pad = _round_up(M, tm)
    n_m = m_pad // tm

    tk = max(lane_multiple, (int(tk) // lane_multiple) * lane_multiple)
    if _round_up(K, lane_multiple) <= tk:
        k_pad = _round_up(K, lane_multiple)
        tk = k_pad
    else:
        k_pad = _round_up(K, tk)
    n_k = k_pad // tk

    c_pad = _round_up(C_out, lane_multiple)

    # ---- im2col glue (plain JAX), bf16 BEFORE slicing so the materialized
    # patch matrix and its transpose move half the HBM bytes. K order is
    # (ci, kh, kw) to match weight.reshape(C_out, C_in*KH*KW).
    x_bf = x.astype(jnp.bfloat16)
    x_padded = jnp.pad(x_bf, ((0, 0), (0, 0), (padding, padding), (padding, padding)))
    cols = []
    for kh in range(KH):
        for kw in range(KW):
            cols.append(x_padded[:, :, kh:kh + stride * OH:stride,
                                 kw:kw + stride * OW:stride])       # [N, C_in, OH, OW]
    patches = jnp.stack(cols, axis=2)                                # [N, C_in, KH*KW, OH, OW]
    patches = patches.transpose(0, 3, 4, 1, 2).reshape(M, K)         # [M, K], rows (n, oh, ow)
    patches = jnp.pad(patches, ((0, m_pad - M), (0, k_pad - K)))     # zero rows => 0 stat contrib

    w2d = weight.astype(jnp.bfloat16).reshape(C_out, K).T            # [K, C_out]
    w2d = jnp.pad(w2d, ((0, k_pad - K), (0, c_pad - C_out)))

    # ---- pass 1: K-tiled GEMM + per-tile partial statistics.
    vmem1 = (2 * tm * tk * 2            # double-buffered bf16 patch tiles
             + 2 * tk * c_pad * 2       # double-buffered bf16 weight tiles
             + 2 * tm * c_pad * 2       # double-buffered bf16 y tiles
             + 2 * 2 * 8 * c_pad * 4    # stat partial tiles
             + tm * c_pad * 4)          # fp32 accumulator scratch
    cost1 = pl.CostEstimate(
        flops=2 * m_pad * k_pad * c_pad,
        transcendentals=0,
        bytes_accessed=(m_pad * k_pad * 2 + n_m * k_pad * c_pad * 2
                        + m_pad * c_pad * 2 + 2 * n_m * 8 * c_pad * 4))
    y2d, sum_p, ssq_p = pl.pallas_call(
        _gemm_stats_kernel,
        out_shape=(jax.ShapeDtypeStruct((m_pad, c_pad), jnp.bfloat16),
                   jax.ShapeDtypeStruct((n_m * 8, c_pad), jnp.float32),
                   jax.ShapeDtypeStruct((n_m * 8, c_pad), jnp.float32)),
        grid=(n_m, n_k),
        in_specs=[pl.BlockSpec((tm, tk), lambda i, k: (i, k)),
                  pl.BlockSpec((tk, c_pad), lambda i, k: (k, 0))],
        out_specs=(pl.BlockSpec((tm, c_pad), lambda i, k: (i, 0)),
                   pl.BlockSpec((8, c_pad), lambda i, k: (i, 0)),
                   pl.BlockSpec((8, c_pad), lambda i, k: (i, 0))),
        scratch_shapes=[pltpu.VMEM((tm, c_pad), jnp.float32)],
        compiler_params=pltpu.CompilerParams(
            dimension_semantics=("parallel", "arbitrary"),
            vmem_limit_bytes=_vmem_limit(vmem1)),
        cost_estimate=cost1,
    )(patches, w2d)

    # ---- finalize BN statistics (tiny [c_pad] math, plain JAX, fp32).
    # Padded rows are zero so they contribute nothing; divide by the true M.
    m_f = jnp.float32(M)
    sum_c = jnp.sum(sum_p, axis=0)
    ssq_c = jnp.sum(ssq_p, axis=0)
    mean = sum_c / m_f
    var = jnp.maximum(ssq_c / m_f - mean * mean, 0.0)   # biased var (PyTorch normalization)
    gamma_p = jnp.pad(gamma.astype(jnp.float32), (0, c_pad - C_out))
    beta_p = jnp.pad(beta.astype(jnp.float32), (0, c_pad - C_out))
    inv_std = jax.lax.rsqrt(var + eps)
    scale = (gamma_p * inv_std).reshape(1, c_pad)
    shift = (beta_p - mean * gamma_p * inv_std).reshape(1, c_pad)

    # ---- pass 2: tiled normalize + affine + activation (mem-bound).
    out_itemsize = jnp.dtype(out_dtype).itemsize
    vmem2 = 2 * tm * c_pad * 2 + 2 * tm * c_pad * out_itemsize + 2 * c_pad * 4
    cost2 = pl.CostEstimate(
        flops=3 * m_pad * c_pad,
        transcendentals=0,
        bytes_accessed=m_pad * c_pad * 2 + m_pad * c_pad * out_itemsize + 2 * c_pad * 4)
    out2d = pl.pallas_call(
        functools.partial(_bn_act_kernel, neg_slope=relu_leak),
        out_shape=jax.ShapeDtypeStruct((m_pad, c_pad), out_dtype),
        grid=(n_m,),
        in_specs=[pl.BlockSpec((tm, c_pad), lambda i: (i, 0)),
                  pl.BlockSpec((1, c_pad), lambda i: (0, 0)),
                  pl.BlockSpec((1, c_pad), lambda i: (0, 0))],
        out_specs=pl.BlockSpec((tm, c_pad), lambda i: (i, 0)),
        compiler_params=pltpu.CompilerParams(
            dimension_semantics=("parallel",),
            vmem_limit_bytes=_vmem_limit(vmem2)),
        cost_estimate=cost2,
    )(y2d, scale, shift)

    # Lane-dense NHWC slab; only transpose to NCHW if PyTorch layout is required.
    out = out2d[:M, :C_out].reshape(N, OH, OW, C_out)
    if data_format == "NHWC":
        return out
    return out.transpose(0, 3, 1, 2)


# --------------------------------------------------------------------------
# Reference (plain JAX). Inputs are cast through bf16 to match MXU operand
# precision; conv/BN are computed in fp32.
# --------------------------------------------------------------------------
def _reference(x, weight, gamma, beta, *, stride=2, padding=1, eps=1e-5,
               relu_leak=None):
    xq = x.astype(jnp.bfloat16).astype(jnp.float32)
    wq = weight.astype(jnp.bfloat16).astype(jnp.float32)
    y = jax.lax.conv_general_dilated(
        xq, wq, window_strides=(stride, stride),
        padding=((padding, padding), (padding, padding)),
        dimension_numbers=("NCHW", "OIHW", "NCHW"),
        precision=jax.lax.Precision.HIGHEST)
    mean = jnp.mean(y, axis=(0, 2, 3), keepdims=True)
    var = jnp.mean((y - mean) ** 2, axis=(0, 2, 3), keepdims=True)
    y_hat = (y - mean) * jax.lax.rsqrt(var + eps)
    y_hat = y_hat * gamma.reshape(1, -1, 1, 1) + beta.reshape(1, -1, 1, 1)
    if relu_leak is None:
        return jnp.maximum(y_hat, 0.0)
    return jnp.where(y_hat >= 0.0, y_hat, relu_leak * y_hat)


if __name__ == "__main__":
    key = jax.random.PRNGKey(0)
    k1, k2, k3, k4 = jax.random.split(key, 4)

    # --- test 1: ConvBlock(4, 8), ReLU. tm=64 -> 2 M-tiles, exercising the
    # per-tile partial-stat reduction path.
    N, C_in, H, W = 2, 4, 16, 16
    C_out, KH, KW = 8, 4, 4
    x = jax.random.normal(k1, (N, C_in, H, W), dtype=jnp.float32)
    weight = jax.random.normal(k2, (C_out, C_in, KH, KW), dtype=jnp.float32) * 0.1
    gamma = jnp.ones((C_out,), dtype=jnp.float32)   # BatchNorm2d default weight
    beta = jnp.zeros((C_out,), dtype=jnp.float32)   # BatchNorm2d default bias

    out = conv_block_forward(x, weight, gamma, beta, relu_leak=None, tm=64)
    out = jax.block_until_ready(out)
    ref = _reference(x, weight, gamma, beta, relu_leak=None)
    assert out.shape == (N, C_out, H // 2, W // 2), out.shape
    err1 = float(jnp.max(jnp.abs(out - ref)))
    assert jnp.allclose(out, ref, rtol=2e-2, atol=2e-2), err1

    # --- test 2: ConvBlock(16, 8), LeakyReLU(0.2). tk=128 with K=256 -> 2 K-steps,
    # exercising the fp32 accumulator / last-k writeback path.
    N2, C_in2, H2, W2 = 2, 16, 8, 8
    C_out2 = 8
    x2 = jax.random.normal(k3, (N2, C_in2, H2, W2), dtype=jnp.float32)
    w2 = jax.random.normal(k4, (C_out2, C_in2, KH, KW), dtype=jnp.float32) * 0.05
    g2 = jnp.ones((C_out2,), dtype=jnp.float32)
    b2 = jnp.zeros((C_out2,), dtype=jnp.float32)

    out2 = conv_block_forward(x2, w2, g2, b2, relu_leak=0.2, tm=32, tk=128)
    out2 = jax.block_until_ready(out2)
    ref2 = _reference(x2, w2, g2, b2, relu_leak=0.2)
    assert out2.shape == (N2, C_out2, H2 // 2, W2 // 2), out2.shape
    err2 = float(jnp.max(jnp.abs(out2 - ref2)))
    assert jnp.allclose(out2, ref2, rtol=2e-2, atol=2e-2), err2

    print("KERNEL_OK")
</pallas_src>

<mosaic_0001>
module attributes {stable_mosaic.version = 11 : i64} {
  func.func @_gemm_stats_kernel(%arg0: i32, %arg1: i32, %arg2: memref<64x128xbf16, #tpu.memory_space<vmem>>, %arg3: memref<128x128xbf16, #tpu.memory_space<vmem>>, %arg4: memref<64x128xbf16, #tpu.memory_space<vmem>>, %arg5: memref<8x128xf32, #tpu.memory_space<vmem>>, %arg6: memref<8x128xf32, #tpu.memory_space<vmem>>, %arg7: memref<64x128xf32, #tpu.memory_space<vmem>>) attributes {dimension_semantics = [#tpu.dimension_semantics<parallel>, #tpu.dimension_semantics<arbitrary>], iteration_bounds = array<i64: 2, 1>, scalar_prefetch = 0 : i64, scratch_operands = 1 : i64, tpu.core_type = #tpu.core_type<tc>, window_params = [{transform_indices = @transform_0, window_bounds = array<i64: 64, 128>}, {transform_indices = @transform_1, window_bounds = array<i64: 128, 128>}, {transform_indices = @transform_2, window_bounds = array<i64: 64, 128>}, {transform_indices = @transform_3, window_bounds = array<i64: 8, 128>}, {transform_indices = @transform_4, window_bounds = array<i64: 8, 128>}]} {
    %c0_i32 = arith.constant 0 : i32
    %0 = arith.cmpi eq, %arg1, %c0_i32 : i32
    %1 = arith.extui %0 : i1 to i32
    %c0_i32_0 = arith.constant 0 : i32
    %2 = arith.cmpi ne, %1, %c0_i32_0 : i32
    scf.if %2 {
      %cst_10 = arith.constant 0.000000e+00 : f32
      %12 = vector.broadcast %cst_10 : f32 to vector<64x128xf32>
      %c0_11 = arith.constant 0 : index
      %c0_12 = arith.constant 0 : index
      %13 = vector.load %arg7[%c0_11, %c0_12] : memref<64x128xf32, #tpu.memory_space<vmem>>, vector<64x128xf32>
      tpu.vector_store %arg7[%c0_11, %c0_12], %12 {strides = array<i32>} : memref<64x128xf32, #tpu.memory_space<vmem>>, vector<64x128xf32>,
    } else {
    }
    %c0 = arith.constant 0 : index
    %c0_1 = arith.constant 0 : index
    %3 = vector.load %arg7[%c0, %c0_1] : memref<64x128xf32, #tpu.memory_space<vmem>>, vector<64x128xf32>
    %c0_2 = arith.constant 0 : index
    %c0_3 = arith.constant 0 : index
    %4 = vector.load %arg2[%c0_2, %c0_3] : memref<64x128xbf16, #tpu.memory_space<vmem>>, vector<64x128xbf16>
    %c0_4 = arith.constant 0 : index
    %c0_5 = arith.constant 0 : index
    %5 = vector.load %arg3[%c0_4, %c0_5] : memref<128x128xbf16, #tpu.memory_space<vmem>>, vector<128x128xbf16>
    %cst = arith.constant dense<0.000000e+00> : vector<64x128xf32>
    %6 = tpu.matmul %4, %5, %cst {dimension_numbers = #tpu.dot_dimension_numbers<[1], [0], [0], [1], [0, 0, 1, 1], [], []>} : vector<64x128xbf16>, vector<128x128xbf16>, vector<64x128xf32> -> vector<64x128xf32>
    %7 = arith.addf %3, %6 : vector<64x128xf32>
    %c0_6 = arith.constant 0 : index
    %c0_7 = arith.constant 0 : index
    %8 = vector.load %arg7[%c0_6, %c0_7] : memref<64x128xf32, #tpu.memory_space<vmem>>, vector<64x128xf32>
    tpu.vector_store %arg7[%c0_6, %c0_7], %7 {strides = array<i32>} : memref<64x128xf32, #tpu.memory_space<vmem>>, vector<64x128xf32>,
    %c0_i32_8 = arith.constant 0 : i32
    %9 = arith.cmpi eq, %arg1, %c0_i32_8 : i32
    %10 = arith.extui %9 : i1 to i32
    %c0_i32_9 = arith.constant 0 : i32
    %11 = arith.cmpi ne, %10, %c0_i32_9 : i32
    scf.if %11 {
      %c0_10 = arith.constant 0 : index
      %c0_11 = arith.constant 0 : index
      %12 = vector.load %arg7[%c0_10, %c0_11] : memref<64x128xf32, #tpu.memory_space<vmem>>, vector<64x128xf32>
      %13 = arith.truncf %12 : vector<64x128xf32> to vector<64x128xbf16>
      %c0_12 = arith.constant 0 : index
      %c0_13 = arith.constant 0 : index
      %14 = vector.load %arg4[%c0_12, %c0_13] : memref<64x128xbf16, #tpu.memory_space<vmem>>, vector<64x128xbf16>
      tpu.vector_store %arg4[%c0_12, %c0_13], %13 {strides = array<i32>} : memref<64x128xbf16, #tpu.memory_space<vmem>>, vector<64x128xbf16>,
      %15 = vector.shape_cast %12 : vector<64x128xf32> to vector<8x8x128xf32>
      %cst_14 = arith.constant dense<0.000000e+00> : vector<8x128xf32>
      %16 = vector.multi_reduction <add>, %15, %cst_14 [0] : vector<8x8x128xf32> to vector<8x128xf32>
      %c0_15 = arith.constant 0 : index
      %c0_16 = arith.constant 0 : index
      %17 = vector.load %arg5[%c0_15, %c0_16] : memref<8x128xf32, #tpu.memory_space<vmem>>, vector<8x128xf32>
      tpu.vector_store %arg5[%c0_15, %c0_16], %16 {strides = array<i32>} : memref<8x128xf32, #tpu.memory_space<vmem>>, vector<8x128xf32>,
      %18 = arith.mulf %15, %15 : vector<8x8x128xf32>
      %cst_17 = arith.constant dense<0.000000e+00> : vector<8x128xf32>
      %19 = vector.multi_reduction <add>, %18, %cst_17 [0] : vector<8x8x128xf32> to vector<8x128xf32>
      %c0_18 = arith.constant 0 : index
      %c0_19 = arith.constant 0 : index
      %20 = vector.load %arg6[%c0_18, %c0_19] : memref<8x128xf32, #tpu.memory_space<vmem>>, vector<8x128xf32>
      tpu.vector_store %arg6[%c0_18, %c0_19], %19 {strides = array<i32>} : memref<8x128xf32, #tpu.memory_space<vmem>>, vector<8x128xf32>,
    } else {
    }
    return
  }
  func.func @transform_0(%arg0: i32, %arg1: i32) -> (i32, i32) {
    %c0_i32 = arith.constant 0 : i32
    return %arg0, %arg1 : i32, i32
  }
  func.func @transform_1(%arg0: i32, %arg1: i32) -> (i32, i32) {
    %c0_i32 = arith.constant 0 : i32
    %c0_i32_0 = arith.constant 0 : i32
    return %arg1, %c0_i32 : i32, i32
  }
  func.func @transform_2(%arg0: i32, %arg1: i32) -> (i32, i32) {
    %c0_i32 = arith.constant 0 : i32
    %c0_i32_0 = arith.constant 0 : i32
    return %arg0, %c0_i32 : i32, i32
  }
  func.func @transform_3(%arg0: i32, %arg1: i32) -> (i32, i32) {
    %c0_i32 = arith.constant 0 : i32
    %c0_i32_0 = arith.constant 0 : i32
    return %arg0, %c0_i32 : i32, i32
  }
  func.func @transform_4(%arg0: i32, %arg1: i32) -> (i32, i32) {
    %c0_i32 = arith.constant 0 : i32
    %c0_i32_0 = arith.constant 0 : i32
    return %arg0, %c0_i32 : i32, i32
  }
}

</mosaic_0001>

<llo_original>
// kernel: tpu_custom_call.1
$region0: #{tpu_custom_call.1}
  #allocation0 [shape = 'u32[]', space=smem, size = 0x4, offset = 0x4, fixed_abs, tag = 'smem constant byte address 0x4 - core index']
  #allocation1 [shape = 'u32[144,128]{1,0:T(1,128)}', space=vmem, size = 0x12000, scoped, tag = 'internal scratch']
  #allocation2 [shape = 'f32[64,128]{1,0:T(8,128)}', space=vmem, size = 0x8000, scoped, tag = 'scratch operand']
  %s0 = inlined_call_operand.hbm [shape: bf16[128,128], index: 0, kind: input, shape index: {}]
  %s1 = inlined_call_operand.hbm [shape: bf16[128,128], index: 1, kind: input, shape index: {}]
  %s2 = inlined_call_operand.hbm [shape: bf16[128,128], index: 2, kind: output, shape index: {0}]
  %s3 = inlined_call_operand.hbm [shape: f32[16,128], index: 3, kind: output, shape index: {1}]
  %s4 = inlined_call_operand.hbm [shape: f32[16,128], index: 4, kind: output, shape index: {2}]
  %5 = xla_tuple %s2, %s3, %s4
  %s6 = sld [smem:[#allocation0]]
  $region73: #{tpu_custom_call.1} parent=0
    _
  %s8 = ssub.s32 1, %s6
  %s9 = scalar_select 0, %s8, %s6
  $region1: #{tpu_custom_call.1} parent=0
    #allocation3 [shape = 'u8[32768]{0}', space=vmem, size = 0x8000, scoped, tag = 'input window, operand 0']
    #allocation4 [shape = 's32[2]{0}', space=sflag, size = 0x8, scoped, tag = 'scoped memory for tpu_custom_call.1']
    #allocation5 [shape = 's32[2]{0}', space=sflag, size = 0x8, scoped, tag = 'scoped memory for tpu_custom_call.1']
    #allocation6 [shape = 'u8[32768]{0}', space=vmem, size = 0x8000, scoped, tag = 'input window, operand 1, single buffered']
    #allocation7 [shape = 's32[1]{0}', space=sflag, size = 0x4, scoped, tag = 'scoped memory for tpu_custom_call.1']
    #allocation8 [shape = 'u8[32768]{0}', space=vmem, size = 0x8000, scoped, tag = 'output window, operand 0']
    #allocation9 [shape = 'u8[8192]{0}', space=vmem, size = 0x2000, scoped, tag = 'output window, operand 1']
    #allocation10 [shape = 's32[2]{0}', space=sflag, size = 0x8, scoped, tag = 'scoped memory for tpu_custom_call.1']
    #allocation11 [shape = 'u8[8192]{0}', space=vmem, size = 0x2000, scoped, tag = 'output window, operand 2']
    %10 = vsyncpa [#allocation4], 0
    %s11 = scalar_lea.sflag [#allocation4], 1
    %12 = vsyncpa %s11, 0
    %13 = vsyncpa [#allocation7], 0
    %14 = vsyncpa [#allocation5], 0
    %s15 = scalar_lea.sflag [#allocation5], 1
    %16 = vsyncpa %s15, 0
    %17 = vsyncpa [#allocation10], 0
    %s18 = scalar_lea.sflag [#allocation10], 1
    %19 = vsyncpa %s18, 0
    loop: start=0, step=1, limit=4
    $region2: #{tpu_custom_call.1} parent=1 // loop_pre_header
      _
    $region3: #{tpu_custom_call.1} parent=1 // loop_header
      %s21 = sphi 0, %s25
      %p22 = scmp.ge.s32.totalorder %s21, 4
      %s28 = sphi 0, %s40
      %s29 = sphi 0, %s36
      %s30 = sphi 0, %s28
      %s31 = sphi 0, %s29
      %s32 = sphi 0, %s30
      %s33 = sphi 0, %s31
      %s45 = sphi 0, %s47
      %s48 = sphi 0, %s45
      %s49 = sphi 0, %s48
      %s65 = sphi 0, %s49
      %s71 = sphi 0, %s73
      %s74 = sphi 0, %s71
      %s75 = sphi 0, %s74
      %s91 = sphi 0, %s75
      %s97 = sphi 0, %s99
      %s100 = sphi 0, %s97
      %s101 = sphi 0, %s100
      %s117 = sphi 0, %s101
      %s123 = sphi 0, %s125
      %s126 = sphi 0, %s123
      %s127 = sphi 0, %s126
      %s143 = sphi 0, %s127
      %s149 = sphi 0, %s151
      %s152 = sphi 0, %s149
      %s153 = sphi 0, %s152
      %s169 = sphi 0, %s153
    $region4: #{tpu_custom_call.1} parent=1 // loop_header_branch
      %24 = sbr.rel (%p22) target = $region8
    $region5: #{tpu_custom_call.1} parent=1 // loop_body
      %s26 = ssub.s32 %s21, 1
      %s27 = ssub.s32 %s21, 2
      %s34 = sadd.s32 1, %s29
      %p35 = scmp.ge.s32.totalorder %s34, 1
      %s36 = scalar_select %p35, 0, %s34
      %s37 = sadd.s32 1, %s28
      %s38 = scalar_select %p35, %s37, %s28
      %p39 = scmp.ge.s32.totalorder %s38, 2
      %s40 = scalar_select %p39, 0, %s38
      %s41 = ssub.s32 %s28, %s40
      %s42 = ssub.s32 %s29, %s36
      %s43 = sor.u32 %s41, %s42
      %p44 = scmp.eq.s32.totalorder %s43, 0
      %s46 = sadd.s32 %s45, 1
      %s47 = scalar_select %p44, %s45, %s46
      %p50 = pneg %p44
      %p51 = scmp.eq.s32.totalorder %s21, 1
      %p52 = por %p50, %p51
      %p53 = scmp.ne.s32.totalorder %s45, %s48
      %p54 = scmp.eq.s32.totalorder %s21, 0
      %p55 = por %p53, %p54
      %p56 = scmp.ne.s32.totalorder %s45, %s48
      %p57 = scmp.eq.s32.totalorder %s26, 1
      %p58 = por %p56, %p57
      %p59 = scmp.ne.s32.totalorder %s48, %s49
      %p60 = scmp.eq.s32.totalorder %s26, 0
      %p61 = por %p59, %p60
      %p62 = scmp.ne.s32.totalorder %s48, %s49
      %p63 = scmp.eq.s32.totalorder %s27, 1
      %p64 = por %p62, %p63
      %p66 = scmp.ne.s32.totalorder %s49, %s65
      %p67 = scmp.eq.s32.totalorder %s27, 0
      %p68 = por %p66, %p67
      %s69 = ssub.s32 %s29, %s36
      %p70 = scmp.eq.s32.totalorder %s69, 0
      %s72 = sadd.s32 %s71, 1
      %s73 = scalar_select %p70, %s71, %s72
      %p76 = pneg %p70
      %p77 = scmp.eq.s32.totalorder %s21, 1
      %p78 = por %p76, %p77
      %p79 = scmp.ne.s32.totalorder %s71, %s74
      %p80 = scmp.eq.s32.totalorder %s21, 0
      %p81 = por %p79, %p80
      %p82 = scmp.ne.s32.totalorder %s71, %s74
      %p83 = scmp.eq.s32.totalorder %s26, 1
      %p84 = por %p82, %p83
      %p85 = scmp.ne.s32.totalorder %s74, %s75
      %p86 = scmp.eq.s32.totalorder %s26, 0
      %p87 = por %p85, %p86
      %p88 = scmp.ne.s32.totalorder %s74, %s75
      %p89 = scmp.eq.s32.totalorder %s27, 1
      %p90 = por %p88, %p89
      %p92 = scmp.ne.s32.totalorder %s75, %s91
      %p93 = scmp.eq.s32.totalorder %s27, 0
      %p94 = por %p92, %p93
      %s95 = ssub.s32 %s28, %s40
      %p96 = scmp.eq.s32.totalorder %s95, 0
      %s98 = sadd.s32 %s97, 1
      %s99 = scalar_select %p96, %s97, %s98
      %p102 = pneg %p96
      %p103 = scmp.eq.s32.totalorder %s21, 1
      %p104 = por %p102, %p103
      %p105 = scmp.ne.s32.totalorder %s97, %s100
      %p106 = scmp.eq.s32.totalorder %s21, 0
      %p107 = por %p105, %p106
      %p108 = scmp.ne.s32.totalorder %s97, %s100
      %p109 = scmp.eq.s32.totalorder %s26, 1
      %p110 = por %p108, %p109
      %p111 = scmp.ne.s32.totalorder %s100, %s101
      %p112 = scmp.eq.s32.totalorder %s26, 0
      %p113 = por %p111, %p112
      %p114 = scmp.ne.s32.totalorder %s100, %s101
      %p115 = scmp.eq.s32.totalorder %s27, 1
      %p116 = por %p114, %p115
      %p118 = scmp.ne.s32.totalorder %s101, %s117
      %p119 = scmp.eq.s32.totalorder %s27, 0
      %p120 = por %p118, %p119
      %s121 = ssub.s32 %s28, %s40
      %p122 = scmp.eq.s32.totalorder %s121, 0
      %s124 = sadd.s32 %s123, 1
      %s125 = scalar_select %p122, %s123, %s124
      %p128 = pneg %p122
      %p129 = scmp.eq.s32.totalorder %s21, 1
      %p130 = por %p128, %p129
      %p131 = scmp.ne.s32.totalorder %s123, %s126
      %p132 = scmp.eq.s32.totalorder %s21, 0
      %p133 = por %p131, %p132
      %p134 = scmp.ne.s32.totalorder %s123, %s126
      %p135 = scmp.eq.s32.totalorder %s26, 1
      %p136 = por %p134, %p135
      %p137 = scmp.ne.s32.totalorder %s126, %s127
      %p138 = scmp.eq.s32.totalorder %s26, 0
      %p139 = por %p137, %p138
      %p140 = scmp.ne.s32.totalorder %s126, %s127
      %p141 = scmp.eq.s32.totalorder %s27, 1
      %p142 = por %p140, %p141
      %p144 = scmp.ne.s32.totalorder %s127, %s143
      %p145 = scmp.eq.s32.totalorder %s27, 0
      %p146 = por %p144, %p145
      %s147 = ssub.s32 %s28, %s40
      %p148 = scmp.eq.s32.totalorder %s147, 0
      %s150 = sadd.s32 %s149, 1
      %s151 = scalar_select %p148, %s149, %s150
      %p154 = pneg %p148
      %p155 = scmp.eq.s32.totalorder %s21, 1
      %p156 = por %p154, %p155
      %p157 = scmp.ne.s32.totalorder %s149, %s152
      %p158 = scmp.eq.s32.totalorder %s21, 0
      %p159 = por %p157, %p158
      %p160 = scmp.ne.s32.totalorder %s149, %s152
      %p161 = scmp.eq.s32.totalorder %s26, 1
      %p162 = por %p160, %p161
      %p163 = scmp.ne.s32.totalorder %s152, %s153
      %p164 = scmp.eq.s32.totalorder %s26, 0
      %p165 = por %p163, %p164
      %p166 = scmp.ne.s32.totalorder %s152, %s153
      %p167 = scmp.eq.s32.totalorder %s27, 1
      %p168 = por %p166, %p167
      %p170 = scmp.ne.s32.totalorder %s153, %s169
      %p171 = scmp.eq.s32.totalorder %s27, 0
      %p172 = por %p170, %p171
      %p173 = scmp.le.s32.totalorder 1, %s21
      %p174 = scmp.lt.s32.totalorder %s21, 3
      %p175 = pnand %p173, %p174
      %p176 = pneg %p175
      // Predicated region
      $region9: #{tpu_custom_call.1} parent=5 // pred_check
        _
      $region10: #{tpu_custom_call.1} parent=5 // pred_check_branch
        %178 = sbr.rel (%p175) target = $region12
      $region11: #{tpu_custom_call.1} parent=5 // pred_region
        %s179 = ssub.s32 %s21, 1
        // Predicated region
        $region13: #{tpu_custom_call.1} parent=11 // pred_check
          %p180 = pneg %p87
        $region14: #{tpu_custom_call.1} parent=11 // pred_check_branch
          %182 = sbr.rel (%p180) target = $region16
        $region15: #{tpu_custom_call.1} parent=11 // pred_region
          %s183 = smul.u32 16, %s31
          %s185 = ssub.s32 1024, 1024
          %186 = vsyncadd [#allocation7], %s185
          %s187 = smul.addr %s183, 64
          %s188 = scalar_lea.hbm %s1, %s187
          %s189 = sshll.u32 [#allocation6], 4
          %s190 = int_to_ptr.vmem [resolvable:$true] %s189
          %195 = dma.hbm_to_vmem [thread:$0]  %s188, 1024, %s190, [#allocation7], 64, 64, 4
        $region16: #{tpu_custom_call.1} parent=11 // pred_fallthru
          _
      $region12: #{tpu_custom_call.1} parent=5 // pred_fallthru
        _
      %p196 = scmp.lt.s32.totalorder %s21, 2
      // Predicated region
      $region17: #{tpu_custom_call.1} parent=5 // pred_check
        %p197 = pneg %p196
      $region18: #{tpu_custom_call.1} parent=5 // pred_check_branch
        %199 = sbr.rel (%p197) target = $region20
      $region19: #{tpu_custom_call.1} parent=5 // pred_region
        // Predicated region
        $region21: #{tpu_custom_call.1} parent=19 // pred_check
          %p200 = pneg %p55
        $region22: #{tpu_custom_call.1} parent=19 // pred_check_branch
          %202 = sbr.rel (%p200) target = $region24
        $region23: #{tpu_custom_call.1} parent=19 // pred_region
          %s203 = sand.u32 %s45, 1
          %s204 = scalar_lea.sflag [#allocation4], %s203
          %s205 = sand.u32 %s45, 1
          %s206 = smul.addr %s205, 32
          %s207 = scalar_lea.vmem [#allocation3], %s206
          %s208 = smul.u32 8, %s28
          %s210 = ssub.s32 512, 512
          %211 = vsyncadd %s204, %s210
          %s212 = sadd.s32 %s29, %s208
          %s213 = smul.addr %s212, 64
          %s214 = scalar_lea.hbm %s0, %s213
          %s215 = sshll.u32 %s207, 4
          %s216 = int_to_ptr.vmem [resolvable:$true] %s215
          %221 = dma.hbm_to_vmem [thread:$0]  %s214, 512, %s216, %s204, 64, 64, 4
        $region24: #{tpu_custom_call.1} parent=19 // pred_fallthru
          _
      $region20: #{tpu_custom_call.1} parent=5 // pred_fallthru
        _
      %p222 = scmp.le.s32.totalorder 1, %s21
      %p223 = scmp.lt.s32.totalorder %s21, 3
      %p224 = pnand %p222, %p223
      %p225 = pneg %p224
      // Predicated region
      $region25: #{tpu_custom_call.1} parent=5 // pred_check
        _
      $region26: #{tpu_custom_call.1} parent=5 // pred_check_branch
        %227 = sbr.rel (%p224) target = $region28
      $region27: #{tpu_custom_call.1} parent=5 // pred_region
        %s228 = ssub.s32 %s21, 1
        %s229 = sand.u32 %s48, 1
        %s230 = scalar_lea.sflag [#allocation4], %s229
        %s231 = sand.u32 %s48, 1
        %s232 = smul.addr %s231, 32
        %s233 = scalar_lea.vmem [#allocation3], %s232
        // Predicated region
        $region29: #{tpu_custom_call.1} parent=27 // pred_check
          %p234 = pneg %p61
        $region30: #{tpu_custom_call.1} parent=27 // pred_check_branch
          %236 = sbr.rel (%p234) target = $region32
        $region31: #{tpu_custom_call.1} parent=27 // pred_region
          %237 = dma.done %s230, 512
        $region32: #{tpu_custom_call.1} parent=27 // pred_fallthru
          _
        // Predicated region
        $region33: #{tpu_custom_call.1} parent=27 // pred_check
          %p238 = pneg %p87
        $region34: #{tpu_custom_call.1} parent=27 // pred_check_branch
          %240 = sbr.rel (%p238) target = $region36
        $region35: #{tpu_custom_call.1} parent=27 // pred_region
          %241 = dma.done [#allocation7], 1024
        $region36: #{tpu_custom_call.1} parent=27 // pred_fallthru
          _
        %s242 = sand.u32 %s48, 1
        %s243 = scalar_lea.sflag [#allocation4], %s242
        %s244 = sand.u32 %s48, 1
        %s245 = smul.addr %s244, 32
        %s246 = scalar_lea.vmem [#allocation3], %s245
        %p247 = pneg %p61
        %p248 = pneg %p58
        %p249 = pneg %p87
        %p250 = pneg %p84
        %p251 = pneg %p113
        %p252 = pneg %p110
        %s253 = sand.u32 %s100, 1
        %s254 = scalar_lea.sflag [#allocation5], %s253
        %s255 = sand.u32 %s100, 1
        %s256 = smul.addr %s255, 32
        %s257 = scalar_lea.vmem [#allocation8], %s256
        %p258 = pneg %p139
        %p259 = pneg %p136
        %s260 = sand.u32 %s26, 1
        %s261 = scalar_lea.sflag [#allocation10], %s260
        %s262 = sand.u32 %s126, 1
        %s263 = smul.addr %s262, 8
        %s264 = scalar_lea.vmem [#allocation9], %s263
        %p265 = pneg %p165
        %p266 = pneg %p162
        %s267 = sand.u32 %s26, 1
        %s268 = scalar_lea.sflag [#allocation10], %s267
        %s269 = sand.u32 %s152, 1
        %s270 = smul.addr %s269, 8
        %s271 = scalar_lea.vmem [#allocation11], %s270
        %s272 = smul.u32 8, %s30
        %s273 = smul.u32 16, %s31
        %s274 = smul.u32 8, %s30
        %p276 = scmp.eq.s32.totalorder %s31, 0
        // Predicated region
        $region37: #{tpu_custom_call.1} parent=27 // pred_check
          %p277 = pneg %p276
        $region38: #{tpu_custom_call.1} parent=27 // pred_check_branch
          %279 = sbr.rel (%p277) target = $region40
        $region39: #{tpu_custom_call.1} parent=27 // pred_region
          %280 = vst [vmem:[#allocation2] sm:$0xff] 0.0
          %281 = vst [vmem:[#allocation2 + $0x8] sm:$0xff] 0.0
          %282 = vst [vmem:[#allocation2 + $0x10] sm:$0xff] 0.0
          %283 = vst [vmem:[#allocation2 + $0x18] sm:$0xff] 0.0
          %284 = vst [vmem:[#allocation2 + $0x20] sm:$0xff] 0.0
          %285 = vst [vmem:[#allocation2 + $0x28] sm:$0xff] 0.0
          %286 = vst [vmem:[#allocation2 + $0x30] sm:$0xff] 0.0
          %287 = vst [vmem:[#allocation2 + $0x38] sm:$0xff] 0.0
        $region40: #{tpu_custom_call.1} parent=27 // pred_fallthru
          _
        %v288 = vld [vmem:[#allocation2] sm:$0xff]
        %v289 = vld [vmem:[#allocation2 + $0x8] sm:$0xff]
        %v290 = vld [vmem:[#allocation2 + $0x10] sm:$0xff]
        %v291 = vld [vmem:[#allocation2 + $0x18] sm:$0xff]
        %v292 = vld [vmem:[#allocation2 + $0x20] sm:$0xff]
        %v293 = vld [vmem:[#allocation2 + $0x28] sm:$0xff]
        %v294 = vld [vmem:[#allocation2 + $0x30] sm:$0xff]
        %v295 = vld [vmem:[#allocation2 + $0x38] sm:$0xff]
        %v296 = vld [vmem:[%s233] sm:$0xf]
        %v297 = vld [vmem:[%s233 + $0x4] sm:$0xf]
        %v298 = vld [vmem:[%s233 + $0x8] sm:$0xf]
        %v299 = vld [vmem:[%s233 + $0xc] sm:$0xf]
        %v300 = vld [vmem:[%s233 + $0x10] sm:$0xf]
        %v301 = vld [vmem:[%s233 + $0x14] sm:$0xf]
        %v302 = vld [vmem:[%s233 + $0x18] sm:$0xf]
        %v303 = vld [vmem:[%s233 + $0x1c] sm:$0xf]
        %v304 = vld [vmem:[#allocation6] sm:$0xf]
        %v305 = vld [vmem:[#allocation6 + $0x4] sm:$0xf]
        %v306 = vld [vmem:[#allocation6 + $0x8] sm:$0xf]
        %v307 = vld [vmem:[#allocation6 + $0xc] sm:$0xf]
        %v308 = vld [vmem:[#allocation6 + $0x10] sm:$0xf]
        %v309 = vld [vmem:[#allocation6 + $0x14] sm:$0xf]
        %v310 = vld [vmem:[#allocation6 + $0x18] sm:$0xf]
        %v311 = vld [vmem:[#allocation6 + $0x1c] sm:$0xf]
        %v312 = vld [vmem:[#allocation6 + $0x20] sm:$0xf]
        %v313 = vld [vmem:[#allocation6 + $0x24] sm:$0xf]
        %v314 = vld [vmem:[#allocation6 + $0x28] sm:$0xf]
        %v315 = vld [vmem:[#allocation6 + $0x2c] sm:$0xf]
        %v316 = vld [vmem:[#allocation6 + $0x30] sm:$0xf]
        %v317 = vld [vmem:[#allocation6 + $0x34] sm:$0xf]
        %v318 = vld [vmem:[#allocation6 + $0x38] sm:$0xf]
        %v319 = vld [vmem:[#allocation6 + $0x3c] sm:$0xf]
        %v328 = vunpack.c.l.b16 %v296
        %v329 = vunpack.c.l.b16 %v297
        %v330 = vunpack.c.l.b16 %v298
        %v331 = vunpack.c.l.b16 %v299
        %v332 = vunpack.c.l.b16 %v300
        %v333 = vunpack.c.l.b16 %v301
        %v334 = vunpack.c.l.b16 %v302
        %v335 = vunpack.c.l.b16 %v303
        %v336 = vpack.c.b16 %v329, %v328
        %v337 = vpack.c.b16 %v331, %v330
        %v338 = vpack.c.b16 %v333, %v332
        %v339 = vpack.c.b16 %v335, %v334
        %v360 = vunpack.c.l.b16 %v304
        %v361 = vunpack.c.l.b16 %v305
        %v362 = vunpack.c.l.b16 %v306
        %v363 = vunpack.c.l.b16 %v307
        %v364 = vunpack.c.l.b16 %v308
        %v365 = vunpack.c.l.b16 %v309
        %v366 = vunpack.c.l.b16 %v310
        %v367 = vunpack.c.l.b16 %v311
        %v368 = vunpack.c.l.b16 %v312
        %v369 = vunpack.c.l.b16 %v313
        %v370 = vunpack.c.l.b16 %v314
        %v371 = vunpack.c.l.b16 %v315
        %v372 = vunpack.c.l.b16 %v316
        %v373 = vunpack.c.l.b16 %v317
        %v374 = vunpack.c.l.b16 %v318
        %v375 = vunpack.c.l.b16 %v319
        %v376 = vpack.c.b16 %v361, %v360
        %v377 = vpack.c.b16 %v363, %v362
        %v378 = vpack.c.b16 %v365, %v364
        %v379 = vpack.c.b16 %v367, %v366
        %v380 = vpack.c.b16 %v369, %v368
        %v381 = vpack.c.b16 %v371, %v370
        %v382 = vpack.c.b16 %v373, %v372
        %v383 = vpack.c.b16 %v375, %v374
        %392 = vmatprep.subr.bf16.mxu0 0
        %393 = vmatpush1.bf16.msra.mxu0 %v376
        %394 = vmatprep.subr.bf16.mxu0 0
        %395 = vmatpush1.bf16.msra.mxu0 %v377
        %396 = vmatprep.subr.bf16.mxu0 0
        %397 = vmatpush1.bf16.msra.mxu0 %v378
        %398 = vmatprep.subr.bf16.mxu0 0
        %399 = vmatpush1.bf16.msra.mxu0 %v379
        %400 = vmatprep.subr.bf16.mxu0 0
        %401 = vmatpush1.bf16.msra.mxu0 %v380
        %402 = vmatprep.subr.bf16.mxu0 0
        %403 = vmatpush1.bf16.msra.mxu0 %v381
        %404 = vmatprep.subr.bf16.mxu0 0
        %405 = vmatpush1.bf16.msra.mxu0 %v382
        %406 = vmatprep.subr.bf16.mxu0 0
        %407 = vmatpush1.bf16.msra.mxu0 %v383
        %408 = vmatprep.subr.bf16.mxu0 0
        %409 = vmatpush1.bf16.msra.mxu0 0
        %410 = vmatprep.subr.bf16.mxu0 0
        %411 = vmatpush1.bf16.msra.mxu0 0
        %412 = vmatprep.subr.bf16.mxu0 0
        %413 = vmatpush1.bf16.msra.mxu0 0
        %414 = vmatprep.subr.bf16.mxu0 0
        %415 = vmatpush1.bf16.msra.mxu0 0
        %416 = vmatprep.subr.bf16.mxu0 0
        %417 = vmatpush1.bf16.msra.mxu0 0
        %418 = vmatprep.subr.bf16.mxu0 0
        %419 = vmatpush1.bf16.msra.mxu0 0
        %420 = vmatprep.subr.bf16.mxu0 0
        %421 = vmatpush1.bf16.msra.mxu0 0
        %422 = vmatprep.subr.bf16.mxu0 0
        %423 = vmatpush1.bf16.msra.mxu0 0
        %424 = vmatprep.mubr.bf16.mxu0 0
        %425 = vmatmul.mubr.bf16.gmra.mrb[0].mxu0 %v336
        %v426 = vpop.f32.mrb[0].mxu0
        %v427 = vadd.f32 0.0, %v426
        %v428 = vpop.f32.mrb[0].mxu0
        %v429 = vpop.f32.mrb[0].mxu0
        %v430 = vadd.f32 0.0, %v429
        %v431 = vpop.f32.mrb[0].mxu0
        %432 = vmatprep.mubr.bf16.mxu0 0
        %433 = vmatmul.mubr.bf16.gmra.mrb[0].mxu0 %v337
        %v434 = vpop.f32.mrb[0].mxu0
        %v435 = vadd.f32 0.0, %v434
        %v436 = vpop.f32.mrb[0].mxu0
        %v437 = vpop.f32.mrb[0].mxu0
        %v438 = vadd.f32 0.0, %v437
        %v439 = vpop.f32.mrb[0].mxu0
        %440 = vmatprep.mubr.bf16.mxu0 0
        %441 = vmatmul.mubr.bf16.gmra.mrb[0].mxu0 %v338
        %v442 = vpop.f32.mrb[0].mxu0
        %v443 = vadd.f32 0.0, %v442
        %v444 = vpop.f32.mrb[0].mxu0
        %v445 = vpop.f32.mrb[0].mxu0
        %v446 = vadd.f32 0.0, %v445
        %v447 = vpop.f32.mrb[0].mxu0
        %448 = vmatprep.mubr.bf16.mxu0 0
        %449 = vmatmul.mubr.bf16.gmra.mrb[0].mxu0 %v339
        %v450 = vpop.f32.mrb[0].mxu0
        %v451 = vadd.f32 0.0, %v450
        %v452 = vpop.f32.mrb[0].mxu0
        %v453 = vpop.f32.mrb[0].mxu0
        %v454 = vadd.f32 0.0, %v453
        %v455 = vpop.f32.mrb[0].mxu0
        %456 = vdwg.mxu0
        %v457 = vadd.f32 %v288, %v427
        %v458 = vadd.f32 %v289, %v430
        %v459 = vadd.f32 %v290, %v435
        %v460 = vadd.f32 %v291, %v438
        %v461 = vadd.f32 %v292, %v443
        %v462 = vadd.f32 %v293, %v446
        %v463 = vadd.f32 %v294, %v451
        %v464 = vadd.f32 %v295, %v454
        %465 = vst [vmem:[#allocation2] sm:$0xff] %v457
        %466 = vst [vmem:[#allocation2 + $0x8] sm:$0xff] %v458
        %467 = vst [vmem:[#allocation2 + $0x10] sm:$0xff] %v459
        %468 = vst [vmem:[#allocation2 + $0x18] sm:$0xff] %v460
        %469 = vst [vmem:[#allocation2 + $0x20] sm:$0xff] %v461
        %470 = vst [vmem:[#allocation2 + $0x28] sm:$0xff] %v462
        %471 = vst [vmem:[#allocation2 + $0x30] sm:$0xff] %v463
        %472 = vst [vmem:[#allocation2 + $0x38] sm:$0xff] %v464
        // Predicated region
        $region41: #{tpu_custom_call.1} parent=27 // pred_check
          %p473 = pneg %p276
        $region42: #{tpu_custom_call.1} parent=27 // pred_check_branch
          %475 = sbr.rel (%p473) target = $region44
        $region43: #{tpu_custom_call.1} parent=27 // pred_region
          %v476 = vld [vmem:[#allocation2] sm:$0xff]
          %v477 = vld [vmem:[#allocation2 + $0x8] sm:$0xff]
          %v478 = vld [vmem:[#allocation2 + $0x10] sm:$0xff]
          %v479 = vld [vmem:[#allocation2 + $0x18] sm:$0xff]
          %v480 = vld [vmem:[#allocation2 + $0x20] sm:$0xff]
          %v481 = vld [vmem:[#allocation2 + $0x28] sm:$0xff]
          %v482 = vld [vmem:[#allocation2 + $0x30] sm:$0xff]
          %v483 = vld [vmem:[#allocation2 + $0x38] sm:$0xff]
          %v484 = vpack.c.bf16 %v477, %v476
          %v485 = vpack.c.bf16 %v479, %v478
          %v486 = vpack.c.bf16 %v481, %v480
          %v487 = vpack.c.bf16 %v483, %v482
          %v492 = vunpack.c.l.b16 %v484
          %v493 = vunpack.c.h.b16 %v484
          %v494 = vunpack.c.l.b16 %v485
          %v495 = vunpack.c.h.b16 %v485
          %v496 = vunpack.c.l.b16 %v486
          %v497 = vunpack.c.h.b16 %v486
          %v498 = vunpack.c.l.b16 %v487
          %v499 = vunpack.c.h.b16 %v487
          %v500 = vpack.c.b16 %v492, %v492
          %v501 = vpack.c.b16 %v493, %v493
          %v502 = vpack.c.b16 %v494, %v494
          %v503 = vpack.c.b16 %v495, %v495
          %v504 = vpack.c.b16 %v496, %v496
          %v505 = vpack.c.b16 %v497, %v497
          %v506 = vpack.c.b16 %v498, %v498
          %v507 = vpack.c.b16 %v499, %v499
          %516 = vst [vmem:[%s257] sm:$0xf] %v500
          %517 = vst [vmem:[%s257 + $0x4] sm:$0xf] %v501
          %518 = vst [vmem:[%s257 + $0x8] sm:$0xf] %v502
          %519 = vst [vmem:[%s257 + $0xc] sm:$0xf] %v503
          %520 = vst [vmem:[%s257 + $0x10] sm:$0xf] %v504
          %521 = vst [vmem:[%s257 + $0x14] sm:$0xf] %v505
          %522 = vst [vmem:[%s257 + $0x18] sm:$0xf] %v506
          %523 = vst [vmem:[%s257 + $0x1c] sm:$0xf] %v507
          %v524 = vadd.f32 %v476, %v477
          %v525 = vadd.f32 %v524, %v478
          %v526 = vadd.f32 %v525, %v479
          %v527 = vadd.f32 %v526, %v480
          %v528 = vadd.f32 %v527, %v481
          %v529 = vadd.f32 %v528, %v482
          %v530 = vadd.f32 %v529, %v483
          %531 = vst [vmem:[%s264] sm:$0xff] %v530
          %v532 = vmul.f32 %v476, %v476
          %v533 = vmul.f32 %v477, %v477
          %v534 = vmul.f32 %v478, %v478
          %v535 = vmul.f32 %v479, %v479
          %v536 = vmul.f32 %v480, %v480
          %v537 = vmul.f32 %v481, %v481
          %v538 = vmul.f32 %v482, %v482
          %v539 = vmul.f32 %v483, %v483
          %v540 = vadd.f32 %v532, %v533
          %v541 = vadd.f32 %v540, %v534
          %v542 = vadd.f32 %v541, %v535
          %v543 = vadd.f32 %v542, %v536
          %v544 = vadd.f32 %v543, %v537
          %v545 = vadd.f32 %v544, %v538
          %v546 = vadd.f32 %v545, %v539
          %547 = vst [vmem:[%s271] sm:$0xff] %v546
        $region44: #{tpu_custom_call.1} parent=27 // pred_fallthru
          _
        %s548 = sand.u32 %s100, 1
        %s549 = scalar_lea.sflag [#allocation5], %s548
        %s550 = sand.u32 %s100, 1
        %s551 = smul.addr %s550, 32
        %s552 = scalar_lea.vmem [#allocation8], %s551
        %s553 = sand.u32 %s26, 1
        %s554 = scalar_lea.sflag [#allocation10], %s553
        %s555 = sand.u32 %s126, 1
        %s556 = smul.addr %s555, 8
        %s557 = scalar_lea.vmem [#allocation9], %s556
        %s558 = sand.u32 %s26, 1
        %s559 = scalar_lea.sflag [#allocation10], %s558
        %s560 = sand.u32 %s152, 1
        %s561 = smul.addr %s560, 8
        %s562 = scalar_lea.vmem [#allocation11], %s561
        // Predicated region
        $region45: #{tpu_custom_call.1} parent=27 // pred_check
          %p563 = pneg %p110
        $region46: #{tpu_custom_call.1} parent=27 // pred_check_branch
          %565 = sbr.rel (%p563) target = $region48
        $region47: #{tpu_custom_call.1} parent=27 // pred_region
          %s566 = smul.u32 8, %s30
          %s568 = ssub.s32 512, 512
          %569 = vsyncadd %s549, %s568
          %s570 = smul.addr %s566, 64
          %s571 = scalar_lea.hbm %s2, %s570
          %s572 = sshll.u32 %s552, 4
          %s573 = int_to_ptr.vmem [resolvable:$true] %s572
          %578 = dma.vmem_to_hbm [thread:$0]  %s573, 512, %s571, %s549, 64, 64, 4
        $region48: #{tpu_custom_call.1} parent=27 // pred_fallthru
          _
        // Predicated region
        $region49: #{tpu_custom_call.1} parent=27 // pred_check
          %p579 = pneg %p136
        $region50: #{tpu_custom_call.1} parent=27 // pred_check_branch
          %581 = sbr.rel (%p579) target = $region52
        $region51: #{tpu_custom_call.1} parent=27 // pred_region
          %s583 = ssub.s32 128, 128
          %584 = vsyncadd %s554, %s583
          %s585 = smul.addr %s30, 128
          %s586 = scalar_lea.hbm %s3, %s585
          %s588 = sshll.u32 %s557, 4
          %s589 = int_to_ptr.vmem [resolvable:$true] %s588
          %591 = dma.vmem_to_hbm [thread:$0]  %s589, 128, %s586, %s554
        $region52: #{tpu_custom_call.1} parent=27 // pred_fallthru
          _
        // Predicated region
        $region53: #{tpu_custom_call.1} parent=27 // pred_check
          %p592 = pneg %p162
        $region54: #{tpu_custom_call.1} parent=27 // pred_check_branch
          %594 = sbr.rel (%p592) target = $region56
        $region55: #{tpu_custom_call.1} parent=27 // pred_region
          %s596 = ssub.s32 128, 128
          %597 = vsyncadd %s559, %s596
          %s598 = smul.addr %s30, 128
          %s599 = scalar_lea.hbm %s4, %s598
          %s601 = sshll.u32 %s562, 4
          %s602 = int_to_ptr.vmem [resolvable:$true] %s601
          %604 = dma.vmem_to_hbm [thread:$0]  %s602, 128, %s599, %s559
        $region56: #{tpu_custom_call.1} parent=27 // pred_fallthru
          _
      $region28: #{tpu_custom_call.1} parent=5 // pred_fallthru
        _
      %p605 = scmp.le.s32.totalorder 2, %s21
      // Predicated region
      $region57: #{tpu_custom_call.1} parent=5 // pred_check
        %p606 = pneg %p605
      $region58: #{tpu_custom_call.1} parent=5 // pred_check_branch
        %608 = sbr.rel (%p606) target = $region60
      $region59: #{tpu_custom_call.1} parent=5 // pred_region
        %s609 = ssub.s32 %s21, 2
        // Predicated region
        $region61: #{tpu_custom_call.1} parent=59 // pred_check
          %p610 = pneg %p116
        $region62: #{tpu_custom_call.1} parent=59 // pred_check_branch
          %612 = sbr.rel (%p610) target = $region64
        $region63: #{tpu_custom_call.1} parent=59 // pred_region
          %s613 = sand.u32 %s101, 1
          %s614 = scalar_lea.sflag [#allocation5], %s613
          %s615 = sand.u32 %s101, 1
          %s616 = smul.addr %s615, 32
          %s617 = scalar_lea.vmem [#allocation8], %s616
          %618 = dma.done %s614, 512
        $region64: #{tpu_custom_call.1} parent=59 // pred_fallthru
          _
        // Predicated region
        $region65: #{tpu_custom_call.1} parent=59 // pred_check
          %p619 = pneg %p142
        $region66: #{tpu_custom_call.1} parent=59 // pred_check_branch
          %621 = sbr.rel (%p619) target = $region68
        $region67: #{tpu_custom_call.1} parent=59 // pred_region
          %s622 = sand.u32 %s27, 1
          %s623 = scalar_lea.sflag [#allocation10], %s622
          %s624 = sand.u32 %s127, 1
          %s625 = smul.addr %s624, 8
          %s626 = scalar_lea.vmem [#allocation9], %s625
          %627 = dma.done %s623, 128
        $region68: #{tpu_custom_call.1} parent=59 // pred_fallthru
          _
        // Predicated region
        $region69: #{tpu_custom_call.1} parent=59 // pred_check
          %p628 = pneg %p168
        $region70: #{tpu_custom_call.1} parent=59 // pred_check_branch
          %630 = sbr.rel (%p628) target = $region72
        $region71: #{tpu_custom_call.1} parent=59 // pred_region
          %s631 = sand.u32 %s27, 1
          %s632 = scalar_lea.sflag [#allocation10], %s631
          %s633 = sand.u32 %s153, 1
          %s634 = smul.addr %s633, 8
          %s635 = scalar_lea.vmem [#allocation11], %s634
          %636 = dma.done %s632, 128
        $region72: #{tpu_custom_call.1} parent=59 // pred_fallthru
          _
      $region60: #{tpu_custom_call.1} parent=5 // pred_fallthru
        _
    $region6: #{tpu_custom_call.1} parent=1 // loop_footer
      %s25 = sadd.s32 1, %s21
    $region7: #{tpu_custom_call.1} parent=1 // loop_footer_branch
      %20 = sbr.rel target = $region3
    $region8: #{tpu_custom_call.1} parent=1 // loop_exit
      _
    %637 = vsyncpa [#allocation4], 1
    %s638 = scalar_lea.sflag [#allocation4], 1
    %639 = vsyncpa %s638, 1
    %640 = vsyncpa [#allocation7], 1
    %641 = vsyncpa [#allocation5], 1
    %s642 = scalar_lea.sflag [#allocation5], 1
    %643 = vsyncpa %s642, 1
    %644 = vsyncpa [#allocation10], 1
    %s645 = scalar_lea.sflag [#allocation10], 1
    %646 = vsyncpa %s645, 1

</llo_original>
